<compile_context>
chip_gen: v7x
topology: tpu7x:2x2x1
jax: 0.10.0
libtpu: 0.0.40
codegen_flags: <defaults>
</compile_context>

<pallas_src>
import math
import functools

import jax
import jax.numpy as jnp
from jax import lax
from jax.experimental import pallas as pl
from jax.experimental.pallas import tpu as pltpu


def _round_up(x: int, m: int) -> int:
    return ((x + m - 1) // m) * m


# ----------------------------------------------------------------------------
# Generation-aware VMEM budget / tile caps (v5e/v6e: 128 MiB, v7x: 64 MiB).
# ----------------------------------------------------------------------------
def _tpu_vmem_capacity_bytes() -> int:
    try:
        return int(pltpu.get_tpu_info().vmem_capacity_bytes)
    except Exception:
        return 64 * 1024 * 1024          # conservative (v7x per-core VMEM)


_VMEM_CAP = _tpu_vmem_capacity_bytes()
_VMEM_LIMIT = min((_VMEM_CAP * 3) // 4, 96 * 1024 * 1024)

if _VMEM_CAP >= 100 * 1024 * 1024:       # v5e / v6e: plenty of VMEM -> bigger K/N tiles
    _LIN_TN_MAX, _LIN_TK_MAX = 512, 1024
else:                                    # v7x / unknown: stay conservative
    _LIN_TN_MAX, _LIN_TK_MAX = 256, 512
_LIN_TM_MAX = 256


# ----------------------------------------------------------------------------
# Tiled linear kernel:  y = x @ W^T + b   (W kept in its PyTorch (Out, In) layout;
# the contraction is done with dot_general so no weight transpose is materialized.)
# ----------------------------------------------------------------------------
def _linear_kernel(x_ref, w_ref, b_ref, o_ref, acc_ref):
    @pl.when(pl.program_id(2) == 0)
    def _init():
        acc_ref[...] = jnp.zeros_like(acc_ref)

    acc_ref[...] += lax.dot_general(
        x_ref[...], w_ref[...],
        (((1,), (1,)), ((), ())),                  # contract last dims: x @ W^T
        preferred_element_type=jnp.float32)

    @pl.when(pl.program_id(2) == pl.num_programs(2) - 1)
    def _finalize():
        o_ref[...] = (acc_ref[...] + b_ref[...].astype(jnp.float32)).astype(o_ref.dtype)


def pallas_linear(x, w, b, *, compute_dtype=None,
                  tm_max=_LIN_TM_MAX, tn_max=_LIN_TN_MAX, tk_max=_LIN_TK_MAX):
    """x: (..., In); w: (Out, In) PyTorch layout; b: (Out,). Returns (..., Out)."""
    out_dim, in_dim = w.shape
    lead = x.shape[:-1]
    x2 = x.reshape(-1, in_dim)
    if compute_dtype is not None:                  # bf16 MXU operands, f32 accumulation
        x2 = x2.astype(compute_dtype)
        w = w.astype(compute_dtype)
    b2 = b.astype(jnp.float32).reshape(1, out_dim)

    M, K, N = x2.shape[0], in_dim, out_dim
    tm = min(_round_up(M, 8), tm_max)
    tk = K if K <= tk_max else tk_max              # full dim (no pad) or 128-multiple cap
    tn = N if N <= tn_max else tn_max
    Mp, Kp, Np = _round_up(M, tm), _round_up(K, tk), _round_up(N, tn)

    if Mp > M or Kp > K:
        x2 = jnp.pad(x2, ((0, Mp - M), (0, Kp - K)))
    if Np > N or Kp > K:
        w = jnp.pad(w, ((0, Np - N), (0, Kp - K)))
    if Np > N:
        b2 = jnp.pad(b2, ((0, 0), (0, Np - N)))

    itemsize = x2.dtype.itemsize
    cost = pl.CostEstimate(
        flops=2 * M * K * N,
        transcendentals=0,
        bytes_accessed=(Mp * Kp + Kp * Np + Mp * Np) * itemsize + Np * 4,
    )

    out = pl.pallas_call(
        _linear_kernel,
        out_shape=jax.ShapeDtypeStruct((Mp, Np), x2.dtype),
        grid=(Mp // tm, Np // tn, Kp // tk),
        in_specs=[
            pl.BlockSpec((tm, tk), lambda i, j, k: (i, k)),
            pl.BlockSpec((tn, tk), lambda i, j, k: (j, k)),   # (Out, In) layout, no transpose
            pl.BlockSpec((1, tn), lambda i, j, k: (0, j)),
        ],
        out_specs=pl.BlockSpec((tm, tn), lambda i, j, k: (i, j)),
        scratch_shapes=[pltpu.VMEM((tm, tn), jnp.float32)],
        compiler_params=pltpu.CompilerParams(
            dimension_semantics=("parallel", "parallel", "arbitrary"),
            vmem_limit_bytes=_VMEM_LIMIT),
        cost_estimate=cost,
    )(x2, w, b2)
    return out[:M, :N].reshape(lead + (out_dim,))


# ----------------------------------------------------------------------------
# One-off probe: verify that pltpu.roll with (stride, stride_axis) gives, for slice i
# along stride_axis, jnp.roll(slice_i, shift + i * stride).  If the op is unsupported
# (or the semantics differ) on this chip/JAX version, fall back to the slice-based shift.
# ----------------------------------------------------------------------------
_ROLL_SHIFT_OK = None


def _probe_roll_semantics() -> bool:
    Tq, Lr = 8, 128
    x = jnp.arange(Tq * Lr, dtype=jnp.float32).reshape(Tq, Lr)

    def kern(x_ref, o_ref):
        o_ref[...] = pltpu.roll(x_ref[...], Lr - Tq, 1, stride=1, stride_axis=0)

    try:
        out = pl.pallas_call(
            kern, out_shape=jax.ShapeDtypeStruct((Tq, Lr), jnp.float32))(x)
        expect = jnp.stack([jnp.roll(x[i], (Lr - Tq) + i) for i in range(Tq)])
        return bool(jnp.array_equal(out, expect))
    except Exception:
        return False


def _roll_shift_supported() -> bool:
    global _ROLL_SHIFT_OK
    if _ROLL_SHIFT_OK is None:
        _ROLL_SHIFT_OK = _probe_roll_semantics()
    return _ROLL_SHIFT_OK


# ----------------------------------------------------------------------------
# Relative attention core.
# Grid (B, nq): one batch element / one query tile / ALL heads per step, each head
# processed end-to-end so live f32 intermediates stay O(Tq * S).
#   content_h = Qh Kh^T * 1/sqrt(Dh)   (scale folded into Q once)
#   pos_h     = Qh Rwin^T              Rwin = per-tile band of the projected rel table
#   rel_h[i,j] = pos_h[i, j + Tq - i]  (single strided roll, O(Tq*S))
#   ctx_h     = softmax(content_h + rel_h) Vh        written lane-dense in (B, S, E)
# ----------------------------------------------------------------------------
def _rel_attn_kernel(q_ref, k_ref, v_ref, r_ref, o_ref, *,
                     num_heads, head_dim, seq_len, q_tile, seq_pad, win_len,
                     compute_dtype, use_roll):
    H, Dh, S, Tq, Sp, Lr = num_heads, head_dim, seq_len, q_tile, seq_pad, win_len
    scale = 1.0 / math.sqrt(Dh)
    dn = (((1,), (1,)), ((), ()))                  # contract last dims: A @ B^T

    qi = pl.program_id(1)
    win_start = pl.multiple_of(Sp - Tq - qi * Tq, 8)
    r_win = r_ref[pl.ds(win_start, Lr), :]         # (Lr, Dh)

    q_all = q_ref[0] * scale                       # fold 1/sqrt(Dh) into Q once per step
    if compute_dtype is not None:
        q_all = q_all.astype(compute_dtype)
        r_win = r_win.astype(compute_dtype)

    ctx_cols = []
    for h in range(H):                             # static per-head loop, head end-to-end
        qh = q_all[:, h * Dh:(h + 1) * Dh]         # (Tq, Dh)
        kh = k_ref[0, :, h * Dh:(h + 1) * Dh]      # (S, Dh)
        vh = v_ref[0, :, h * Dh:(h + 1) * Dh]      # (S, Dh)
        if compute_dtype is not None:
            kh = kh.astype(compute_dtype)
            vh = vh.astype(compute_dtype)

        content = lax.dot_general(qh, kh, dn, preferred_element_type=jnp.float32)  # (Tq,S)
        pos = lax.dot_general(qh, r_win, dn, preferred_element_type=jnp.float32)   # (Tq,Lr)

        if use_roll:
            # Row i needs pos[i, j + Tq - i]; per-row amount (Lr-Tq)+i is in [0, Lr).
            rel = pltpu.roll(pos, Lr - Tq, 1, stride=1, stride_axis=0)[:, :S]
        else:
            # Fallback (slower): Tq static slices, as in the original kernel.
            rel = jnp.concatenate(
                [pos[i:i + 1, (Tq - i):(Tq - i + S)] for i in range(Tq)], axis=0)

        scores = content + rel                      # (Tq, S) f32
        scores = scores - jnp.max(scores, axis=-1, keepdims=True)
        e = jnp.exp(scores)
        probs = e * pl.reciprocal(jnp.sum(e, axis=-1, keepdims=True), approx=True)

        ctx_cols.append(jnp.dot(probs.astype(vh.dtype), vh,
                                preferred_element_type=jnp.float32))               # (Tq,Dh)

    ctx = jnp.concatenate(ctx_cols, axis=1)        # (Tq, E) lane-dense single store
    o_ref[0] = ctx.astype(o_ref.dtype)


def rel_attention_core(q, k, v, r, *, num_heads, head_dim,
                       q_tile_target=256, compute_dtype=None):
    """q, k, v: (B, S, E) lane-dense; r: (2S-1, Dh). Returns context (B, S, E)."""
    B, S, E = q.shape
    H, Dh = num_heads, head_dim
    assert E == H * Dh

    Sp8 = _round_up(S, 8)
    Tq = Sp8 if Sp8 <= q_tile_target else q_tile_target
    Sp = _round_up(S, Tq)
    nq = Sp // Tq
    Lr = _round_up(S + Tq, 128)                    # lane-aligned band width for the roll

    # Pad only the query rows (keys stay exact so softmax never sees key padding).
    q_p = jnp.pad(q, ((0, 0), (0, Sp - S), (0, 0))) if Sp > S else q
    # Pad R: front by (Sp - S + 1) so band windows never go negative, back so the
    # in-kernel pl.ds(win_start, Lr) band never reads out of bounds.
    r_len = Sp - Tq + Lr
    front = Sp - S + 1
    back = r_len - front - r.shape[0]
    r_p = jnp.pad(r, ((front, back), (0, 0)))

    use_roll = _roll_shift_supported()
    kernel = functools.partial(
        _rel_attn_kernel, num_heads=H, head_dim=Dh, seq_len=S, q_tile=Tq,
        seq_pad=Sp, win_len=Lr, compute_dtype=compute_dtype, use_roll=use_roll)

    itemsize = q_p.dtype.itemsize
    cost = pl.CostEstimate(
        flops=2 * B * nq * H * Tq * Dh * (2 * S + Lr),
        transcendentals=B * nq * H * Tq * S,
        bytes_accessed=(2 * B * Sp * E + 2 * B * S * E + r_len * Dh) * itemsize,
    )

    out = pl.pallas_call(
        kernel,
        out_shape=jax.ShapeDtypeStruct((B, Sp, E), q_p.dtype),
        grid=(B, nq),
        in_specs=[
            pl.BlockSpec((1, Tq, E), lambda b, i: (b, i, 0)),
            pl.BlockSpec((1, S, E), lambda b, i: (b, 0, 0)),   # K/V depend only on b
            pl.BlockSpec((1, S, E), lambda b, i: (b, 0, 0)),
            pl.BlockSpec((r_len, Dh), lambda b, i: (0, 0)),
        ],
        out_specs=pl.BlockSpec((1, Tq, E), lambda b, i: (b, i, 0)),
        compiler_params=pltpu.CompilerParams(
            dimension_semantics=("parallel", "arbitrary"),
            vmem_limit_bytes=_VMEM_LIMIT),
        cost_estimate=cost,
    )(q_p, k, v, r_p)
    return out[:, :S, :]


# ----------------------------------------------------------------------------
# Parameter init (deterministic, mirrors the module's __init__ shapes).
# Q/K/V weights are also stored pre-concatenated for the fused (E -> 3E) projection.
# ----------------------------------------------------------------------------
def init_params(key, embed_dim, num_heads, max_seq_len):
    head_dim = embed_dim // num_heads
    ks = jax.random.split(key, 10)

    def lin(kw, kb, out_d, in_d):
        bound = 1.0 / math.sqrt(in_d)
        w = jax.random.uniform(kw, (out_d, in_d), jnp.float32, -bound, bound)
        b = jax.random.uniform(kb, (out_d,), jnp.float32, -bound, bound)
        return w, b

    wq, bq = lin(ks[0], ks[1], embed_dim, embed_dim)
    wk, bk = lin(ks[2], ks[3], embed_dim, embed_dim)
    wv, bv = lin(ks[4], ks[5], embed_dim, embed_dim)
    wo, bo = lin(ks[6], ks[7], embed_dim, embed_dim)
    # pos_key_proj: Linear(head_dim, head_dim, bias=False)
    w_pos = jax.random.uniform(ks[8], (head_dim, head_dim), jnp.float32,
                               -1.0 / math.sqrt(head_dim), 1.0 / math.sqrt(head_dim))
    # RelativePositionalEncoding table for positions -(max_seq_len-1) .. +(max_seq_len-1)
    rel_table = 0.02 * jax.random.normal(ks[9], (2 * max_seq_len - 1, head_dim),
                                         jnp.float32)
    return dict(embed_dim=embed_dim, num_heads=num_heads, head_dim=head_dim,
                max_seq_len=max_seq_len,
                wq=wq, bq=bq, wk=wk, bk=bk, wv=wv, bv=bv, wo=wo, bo=bo,
                wqkv=jnp.concatenate([wq, wk, wv], axis=0),
                bqkv=jnp.concatenate([bq, bk, bv], axis=0),
                w_pos=w_pos, rel_table=rel_table)


# ----------------------------------------------------------------------------
# Forward pass — activations stay in lane-dense (B, S, E); no per-head HBM transposes.
# ----------------------------------------------------------------------------
def relative_mha_forward(p, query, key, value, *, compute_dtype=None):
    B, Sq, E = query.shape
    _, Sk, _ = key.shape
    H, Dh = p["num_heads"], p["head_dim"]
    assert Sq == Sk, "rel-shift (as in the PyTorch module) assumes seq_len_q == seq_len_k"

    if query is key and key is value:
        # Self-attention: fused (E -> 3E) projection reads the activation once.
        qkv = pallas_linear(query, p["wqkv"], p["bqkv"], compute_dtype=compute_dtype)
        Q, K, V = qkv[..., :E], qkv[..., E:2 * E], qkv[..., 2 * E:]
    else:
        Q = pallas_linear(query, p["wq"], p["bq"], compute_dtype=compute_dtype)
        K = pallas_linear(key,   p["wk"], p["bk"], compute_dtype=compute_dtype)
        V = pallas_linear(value, p["wv"], p["bv"], compute_dtype=compute_dtype)

    msl = p["max_seq_len"]
    rel_pos_emb = p["rel_table"][msl - Sk: msl + Sk - 1]           # (2S-1, Dh)
    rel_pos_key = pallas_linear(rel_pos_emb, p["w_pos"],
                                jnp.zeros((Dh,), jnp.float32),
                                compute_dtype=compute_dtype)        # bias=False

    ctx = rel_attention_core(Q, K, V, rel_pos_key, num_heads=H, head_dim=Dh,
                             compute_dtype=compute_dtype)
    return pallas_linear(ctx, p["wo"], p["bo"], compute_dtype=compute_dtype)


# ----------------------------------------------------------------------------
# Pure-JAX reference (mirrors the PyTorch forward) for correctness checking
# ----------------------------------------------------------------------------
def reference_forward(p, query, key, value):
    B, S, E = query.shape
    H, Dh = p["num_heads"], p["head_dim"]
    Q = query @ p["wq"].T + p["bq"]
    K = key   @ p["wk"].T + p["bk"]
    V = value @ p["wv"].T + p["bv"]
    Q = Q.reshape(B, S, H, Dh).transpose(0, 2, 1, 3)
    K = K.reshape(B, S, H, Dh).transpose(0, 2, 1, 3)
    V = V.reshape(B, S, H, Dh).transpose(0, 2, 1, 3)
    msl = p["max_seq_len"]
    rel_pos_emb = p["rel_table"][msl - S: msl + S - 1]
    R = rel_pos_emb @ p["w_pos"].T                                  # (2S-1, Dh)
    scale = 1.0 / math.sqrt(Dh)
    content = jnp.einsum("bhqd,bhkd->bhqk", Q, K) * scale
    pos = jnp.einsum("bhqd,ld->bhql", Q, R) * scale                 # (B,H,S,2S-1)
    rel = jnp.stack([pos[:, :, i, S - 1 - i: 2 * S - 1 - i] for i in range(S)],
                    axis=2)                                         # (B,H,S,S)
    probs = jax.nn.softmax(content + rel, axis=-1)
    ctx = jnp.einsum("bhqk,bhkd->bhqd", probs, V)
    ctx = ctx.transpose(0, 2, 1, 3).reshape(B, S, E)
    return ctx @ p["wo"].T + p["bo"]


if __name__ == "__main__":
    B, S, E, H = 2, 8, 32, 4
    MAX_SEQ_LEN = 16

    root = jax.random.PRNGKey(0)
    kparams, kx, kq, kk, kv = jax.random.split(root, 5)
    params = init_params(kparams, E, H, MAX_SEQ_LEN)

    # 1) Self-attention (fused QKV projection path), strict f32 check.
    x = jax.random.normal(kx, (B, S, E), jnp.float32)
    out_self = jax.block_until_ready(relative_mha_forward(params, x, x, x))
    ref_self = jax.block_until_ready(reference_forward(params, x, x, x))
    assert out_self.shape == (B, S, E), out_self.shape
    err_self = jnp.max(jnp.abs(out_self - ref_self))
    assert jnp.allclose(out_self, ref_self, rtol=3e-3, atol=3e-3), \
        f"self-attn max abs err = {err_self}"

    # 2) Distinct query/key/value tensors (separate projections), strict f32 check.
    query = jax.random.normal(kq, (B, S, E), jnp.float32)
    key = jax.random.normal(kk, (B, S, E), jnp.float32)
    value = jax.random.normal(kv, (B, S, E), jnp.float32)
    out = jax.block_until_ready(relative_mha_forward(params, query, key, value))
    ref = jax.block_until_ready(reference_forward(params, query, key, value))
    err = jnp.max(jnp.abs(out - ref))
    assert jnp.allclose(out, ref, rtol=3e-3, atol=3e-3), f"max abs err = {err}"

    # 3) bf16 MXU-operand path (f32 accumulation / f32 softmax), loose numeric check.
    out_bf16 = jax.block_until_ready(
        relative_mha_forward(params, x, x, x, compute_dtype=jnp.bfloat16))
    assert out_bf16.shape == (B, S, E), out_bf16.shape
    err_bf16 = jnp.max(jnp.abs(out_bf16.astype(jnp.float32) - ref_self))
    assert bool(jnp.all(jnp.isfinite(out_bf16.astype(jnp.float32))))
    assert float(err_bf16) < 6e-2, f"bf16 max abs err = {err_bf16}"

    print("KERNEL_OK")
</pallas_src>

<mosaic_0001>
module attributes {stable_mosaic.version = 11 : i64} {
  func.func @_linear_kernel(%arg0: i32, %arg1: i32, %arg2: i32, %arg3: memref<16x32xf32, #tpu.memory_space<vmem>>, %arg4: memref<96x32xf32, #tpu.memory_space<vmem>>, %arg5: memref<1x96xf32, #tpu.memory_space<vmem>>, %arg6: memref<16x96xf32, #tpu.memory_space<vmem>>, %arg7: memref<16x96xf32, #tpu.memory_space<vmem>>) attributes {dimension_semantics = [#tpu.dimension_semantics<parallel>, #tpu.dimension_semantics<parallel>, #tpu.dimension_semantics<arbitrary>], iteration_bounds = array<i64: 1, 1, 1>, scalar_prefetch = 0 : i64, scratch_operands = 1 : i64, tpu.core_type = #tpu.core_type<tc>, window_params = [{transform_indices = @transform_0, window_bounds = array<i64: 16, 32>}, {transform_indices = @transform_1, window_bounds = array<i64: 96, 32>}, {transform_indices = @transform_2, window_bounds = array<i64: 1, 96>}, {transform_indices = @transform_3, window_bounds = array<i64: 16, 96>}]} {
    %c0_i32 = arith.constant 0 : i32
    %0 = arith.cmpi eq, %arg2, %c0_i32 : i32
    %1 = arith.extui %0 : i1 to i32
    %c0_i32_0 = arith.constant 0 : i32
    %2 = arith.cmpi ne, %1, %c0_i32_0 : i32
    scf.if %2 {
      %cst_10 = arith.constant 0.000000e+00 : f32
      %12 = vector.broadcast %cst_10 : f32 to vector<16x96xf32>
      %c0_11 = arith.constant 0 : index
      %c0_12 = arith.constant 0 : index
      %13 = vector.load %arg7[%c0_11, %c0_12] : memref<16x96xf32, #tpu.memory_space<vmem>>, vector<16x96xf32>
      tpu.vector_store %arg7[%c0_11, %c0_12], %12 {strides = array<i32>} : memref<16x96xf32, #tpu.memory_space<vmem>>, vector<16x96xf32>,
    } else {
    }
    %c0 = arith.constant 0 : index
    %c0_1 = arith.constant 0 : index
    %3 = vector.load %arg7[%c0, %c0_1] : memref<16x96xf32, #tpu.memory_space<vmem>>, vector<16x96xf32>
    %c0_2 = arith.constant 0 : index
    %c0_3 = arith.constant 0 : index
    %4 = vector.load %arg3[%c0_2, %c0_3] : memref<16x32xf32, #tpu.memory_space<vmem>>, vector<16x32xf32>
    %c0_4 = arith.constant 0 : index
    %c0_5 = arith.constant 0 : index
    %5 = vector.load %arg4[%c0_4, %c0_5] : memref<96x32xf32, #tpu.memory_space<vmem>>, vector<96x32xf32>
    %cst = arith.constant dense<0.000000e+00> : vector<16x96xf32>
    %6 = tpu.matmul %4, %5, %cst {dimension_numbers = #tpu.dot_dimension_numbers<[1], [1], [0], [0], [0, 0, 1, 0], [], []>} : vector<16x32xf32>, vector<96x32xf32>, vector<16x96xf32> -> vector<16x96xf32>
    %7 = arith.addf %3, %6 : vector<16x96xf32>
    %c0_6 = arith.constant 0 : index
    %c0_7 = arith.constant 0 : index
    %8 = vector.load %arg7[%c0_6, %c0_7] : memref<16x96xf32, #tpu.memory_space<vmem>>, vector<16x96xf32>
    tpu.vector_store %arg7[%c0_6, %c0_7], %7 {strides = array<i32>} : memref<16x96xf32, #tpu.memory_space<vmem>>, vector<16x96xf32>,
    %c0_i32_8 = arith.constant 0 : i32
    %9 = arith.cmpi eq, %arg2, %c0_i32_8 : i32
    %10 = arith.extui %9 : i1 to i32
    %c0_i32_9 = arith.constant 0 : i32
    %11 = arith.cmpi ne, %10, %c0_i32_9 : i32
    scf.if %11 {
      %c0_10 = arith.constant 0 : index
      %c0_11 = arith.constant 0 : index
      %12 = vector.load %arg7[%c0_10, %c0_11] : memref<16x96xf32, #tpu.memory_space<vmem>>, vector<16x96xf32>
      %c0_12 = arith.constant 0 : index
      %c0_13 = arith.constant 0 : index
      %13 = vector.load %arg5[%c0_12, %c0_13] : memref<1x96xf32, #tpu.memory_space<vmem>>, vector<1x96xf32>
      %14 = vector.broadcast %13 : vector<1x96xf32> to vector<16x96xf32>
      %15 = arith.addf %12, %14 : vector<16x96xf32>
      %c0_14 = arith.constant 0 : index
      %c0_15 = arith.constant 0 : index
      %16 = vector.load %arg6[%c0_14, %c0_15] : memref<16x96xf32, #tpu.memory_space<vmem>>, vector<16x96xf32>
      tpu.vector_store %arg6[%c0_14, %c0_15], %15 {strides = array<i32>} : memref<16x96xf32, #tpu.memory_space<vmem>>, vector<16x96xf32>,
    } else {
    }
    return
  }
  func.func @transform_0(%arg0: i32, %arg1: i32, %arg2: i32) -> (i32, i32) {
    %c0_i32 = arith.constant 0 : i32
    return %arg0, %arg2 : i32, i32
  }
  func.func @transform_1(%arg0: i32, %arg1: i32, %arg2: i32) -> (i32, i32) {
    %c0_i32 = arith.constant 0 : i32
    return %arg1, %arg2 : i32, i32
  }
  func.func @transform_2(%arg0: i32, %arg1: i32, %arg2: i32) -> (i32, i32) {
    %c0_i32 = arith.constant 0 : i32
    %c0_i32_0 = arith.constant 0 : i32
    return %c0_i32, %arg1 : i32, i32
  }
  func.func @transform_3(%arg0: i32, %arg1: i32, %arg2: i32) -> (i32, i32) {
    %c0_i32 = arith.constant 0 : i32
    return %arg0, %arg1 : i32, i32
  }
}

</mosaic_0001>

<llo_original>
// kernel: tpu_custom_call.1
$region0: #{tpu_custom_call.1}
  #allocation0 [shape = 'u32[]', space=smem, size = 0x4, offset = 0x4, fixed_abs, tag = 'smem constant byte address 0x4 - core index']
  #allocation1 [shape = 'u32[144,128]{1,0:T(1,128)}', space=vmem, size = 0x12000, scoped, tag = 'internal scratch']
  #allocation2 [shape = 'f32[16,96]{1,0:T(8,128)}', space=vmem, size = 0x2000, scoped, tag = 'scratch operand']
  %s0 = inlined_call_operand.vmem [shape: f32[16,32], index: 0, kind: input, shape index: {}]
  %s1 = inlined_call_operand.vmem [shape: f32[96,32], index: 1, kind: input, shape index: {}]
  %s2 = inlined_call_operand.vmem [shape: f32[1,96], index: 2, kind: input, shape index: {}]
  %s3 = inlined_call_operand.hbm [shape: f32[16,96], index: 3, kind: output, shape index: {}]
  %s4 = sld [smem:[#allocation0]]
  $region30: #{tpu_custom_call.1} parent=0
    _
  %s6 = ssub.s32 1, %s4
  %s7 = scalar_select 0, %s6, %s4
  $region1: #{tpu_custom_call.1} parent=0
    #allocation3 [shape = 'u8[8192]{0}', space=vmem, size = 0x2000, scoped, tag = 'output window, operand 0, single buffered']
    #allocation4 [shape = 's32[1]{0}', space=sflag, size = 0x4, scoped, tag = 'scoped memory for tpu_custom_call.1']
    %8 = vsyncpa [#allocation4], 0
    // Predicated region
    $region2: #{tpu_custom_call.1} parent=1 // pred_check
      _
    $region3: #{tpu_custom_call.1} parent=1 // pred_check_branch
      %10 = sbr.rel (0) target = $region5
    $region4: #{tpu_custom_call.1} parent=1 // pred_region
      _
    $region5: #{tpu_custom_call.1} parent=1 // pred_fallthru
      _
    // Predicated region
    $region6: #{tpu_custom_call.1} parent=1 // pred_check
      _
    $region7: #{tpu_custom_call.1} parent=1 // pred_check_branch
      %12 = sbr.rel (0) target = $region9
    $region8: #{tpu_custom_call.1} parent=1 // pred_region
      _
    $region9: #{tpu_custom_call.1} parent=1 // pred_fallthru
      _
    // Predicated region
    $region10: #{tpu_custom_call.1} parent=1 // pred_check
      _
    $region11: #{tpu_custom_call.1} parent=1 // pred_check_branch
      %14 = sbr.rel (0) target = $region13
    $region12: #{tpu_custom_call.1} parent=1 // pred_region
      _
    $region13: #{tpu_custom_call.1} parent=1 // pred_fallthru
      _
    %p15 = scmp.eq.s32.totalorder 0, 0
    // Predicated region
    $region14: #{tpu_custom_call.1} parent=1 // pred_check
      %p16 = pneg %p15
    $region15: #{tpu_custom_call.1} parent=1 // pred_check_branch
      %18 = sbr.rel (%p16) target = $region17
    $region16: #{tpu_custom_call.1} parent=1 // pred_region
      %vm19 = vcmask 785408
      %20 = vst.msk [vmem:[#allocation2] sm:$0xff] %vm19, 0.0
      %21 = vst.msk [vmem:[#allocation2 + $0x8] sm:$0xff] %vm19, 0.0
    $region17: #{tpu_custom_call.1} parent=1 // pred_fallthru
      _
    %v22 = vld [vmem:[#allocation2] sm:$0xff]
    %v23 = vld [vmem:[#allocation2 + $0x8] sm:$0xff]
    %v24 = vld [vmem:[%s0] sm:$0xff]
    %v25 = vld [vmem:[%s0 + $0x8] sm:$0xff]
    %v26 = vld [vmem:[%s1] sm:$0xff]
    %v27 = vld [vmem:[%s1 + $0x8] sm:$0xff]
    %v28 = vld [vmem:[%s1 + $0x10] sm:$0xff]
    %v29 = vld [vmem:[%s1 + $0x18] sm:$0xff]
    %v30 = vld [vmem:[%s1 + $0x20] sm:$0xff]
    %v31 = vld [vmem:[%s1 + $0x28] sm:$0xff]
    %v32 = vld [vmem:[%s1 + $0x30] sm:$0xff]
    %v33 = vld [vmem:[%s1 + $0x38] sm:$0xff]
    %v34 = vld [vmem:[%s1 + $0x40] sm:$0xff]
    %v35 = vld [vmem:[%s1 + $0x48] sm:$0xff]
    %v36 = vld [vmem:[%s1 + $0x50] sm:$0xff]
    %v37 = vld [vmem:[%s1 + $0x58] sm:$0xff]
    %vm38 = vcmask 261120
    %v40 = vsel %vm38, %v24, 0
    %v43 = vsel %vm38, %v25, 0
    %v46 = vsel %vm38, %v26, 0
    %v49 = vsel %vm38, %v27, 0
    %v52 = vsel %vm38, %v28, 0
    %v55 = vsel %vm38, %v29, 0
    %v58 = vsel %vm38, %v30, 0
    %v61 = vsel %vm38, %v31, 0
    %v64 = vsel %vm38, %v32, 0
    %v67 = vsel %vm38, %v33, 0
    %v70 = vsel %vm38, %v34, 0
    %v73 = vsel %vm38, %v35, 0
    %v76 = vsel %vm38, %v36, 0
    %v79 = vsel %vm38, %v37, 0
    %81 = vmatprep.subr.mxu0 0.0
    %82 = vmatpush1.xpose.msra.mxu0 %v46
    %83 = vmatprep.subr.mxu0 0.0
    %84 = vmatpush1.xpose.msra.mxu0 %v49
    %85 = vmatprep.subr.mxu0 0.0
    %86 = vmatpush1.xpose.msra.mxu0 %v52
    %87 = vmatprep.subr.mxu0 0.0
    %88 = vmatpush1.xpose.msra.mxu0 %v55
    %89 = vmatprep.subr.mxu0 0.0
    %90 = vmatpush1.xpose.msra.mxu0 %v58
    %91 = vmatprep.subr.mxu0 0.0
    %92 = vmatpush1.xpose.msra.mxu0 %v61
    %93 = vmatprep.subr.mxu0 0.0
    %94 = vmatpush1.xpose.msra.mxu0 %v64
    %95 = vmatprep.subr.mxu0 0.0
    %96 = vmatpush1.xpose.msra.mxu0 %v67
    %97 = vmatprep.subr.mxu0 0.0
    %98 = vmatpush1.xpose.msra.mxu0 %v70
    %99 = vmatprep.subr.mxu0 0.0
    %100 = vmatpush1.xpose.msra.mxu0 %v73
    %101 = vmatprep.subr.mxu0 0.0
    %102 = vmatpush1.xpose.msra.mxu0 %v76
    %103 = vmatprep.subr.mxu0 0.0
    %104 = vmatpush1.xpose.msra.mxu0 %v79
    %105 = vmatprep.subr.mxu0 0.0
    %106 = vmatpush1.xpose.msra.mxu0 0.0
    %107 = vmatprep.subr.mxu0 0.0
    %108 = vmatpush1.xpose.msra.mxu0 0.0
    %109 = vmatprep.subr.mxu0 0.0
    %110 = vmatpush1.xpose.msra.mxu0 0.0
    %111 = vmatprep.subr.mxu0 0.0
    %112 = vmatpush1.xpose.msra.mxu0 0.0
    %113 = vmatprep.subr.mxu0 0.0
    %114 = vmatpush1.xpose.msra.mxu0 0.0
    %115 = vmatprep.subr.mxu0 0.0
    %116 = vmatpush1.xpose.msra.mxu0 0.0
    %117 = vmatprep.subr.mxu0 0.0
    %118 = vmatpush1.xpose.msra.mxu0 0.0
    %119 = vmatprep.subr.mxu0 0.0
    %120 = vmatpush1.xpose.msra.mxu0 0.0
    %121 = vmatprep.subr.mxu0 0.0
    %122 = vmatpush1.xpose.msra.mxu0 0.0
    %123 = vmatprep.subr.mxu0 0.0
    %124 = vmatpush1.xpose.msra.mxu0 0.0
    %125 = vmatprep.subr.mxu0 0.0
    %126 = vmatpush1.xpose.msra.mxu0 0.0
    %127 = vmatprep.subr.mxu0 0.0
    %128 = vmatpush1.xpose.msra.mxu0 0.0
    %129 = vmatprep.subr.mxu0 0.0
    %130 = vmatpush1.xpose.msra.mxu0 0.0
    %131 = vmatprep.subr.mxu0 0.0
    %132 = vmatpush1.xpose.msra.mxu0 0.0
    %133 = vmatprep.subr.mxu0 0.0
    %134 = vmatpush1.xpose.msra.mxu0 0.0
    %135 = vmatprep.subr.mxu0 0.0
    %136 = vmatpush1.xpose.msra.mxu0 0.0
    %137 = vmatprep.subr.mxu0 0.0
    %138 = vmatpush1.xpose.msra.mxu0 0.0
    %139 = vmatprep.subr.mxu0 0.0
    %140 = vmatpush1.xpose.msra.mxu0 0.0
    %141 = vmatprep.subr.mxu0 0.0
    %142 = vmatpush1.xpose.msra.mxu0 0.0
    %143 = vmatprep.subr.mxu0 0.0
    %144 = vmatpush1.xpose.msra.mxu0 0.0
    %145 = vmatprep.mubr.f32.mxu0 0.0
    %146 = vmatmul.mubr.f32.gmra.mrb[0].mxu0 %v40
    %v147 = vpop.f32.mrb[0].mxu0
    %v148 = vadd.f32 0.0, %v147
    %v149 = vpop.f32.mrb[0].mxu0
    %150 = vmatprep.mubr.f32.mxu0 0.0
    %151 = vmatmul.mubr.f32.gmra.mrb[0].mxu0 %v43
    %v152 = vpop.f32.mrb[0].mxu0
    %v153 = vadd.f32 0.0, %v152
    %v154 = vpop.f32.mrb[0].mxu0
    %155 = vdwg.mxu0
    %v156 = vadd.f32 %v22, %v148
    %v157 = vadd.f32 %v23, %v153
    %vm158 = vcmask 785408
    %159 = vst.msk [vmem:[#allocation2] sm:$0xff] %vm158, %v156
    %160 = vst.msk [vmem:[#allocation2 + $0x8] sm:$0xff] %vm158, %v157
    // Predicated region
    $region18: #{tpu_custom_call.1} parent=1 // pred_check
      %p161 = pneg %p15
    $region19: #{tpu_custom_call.1} parent=1 // pred_check_branch
      %163 = sbr.rel (%p161) target = $region21
    $region20: #{tpu_custom_call.1} parent=1 // pred_region
      %v164 = vld [vmem:[#allocation2] sm:$0xff]
      %v165 = vld [vmem:[#allocation2 + $0x8] sm:$0xff]
      %v166 = vld [vmem:[%s2] sm:$0x1]
      %v168 = vlaneseq
      %v169 = vshrl.u32 %v168, 7
      %v170 = vsub.s32 0, %v169
      %v171 = vrot.slane %v166, %v170
      %v173 = vadd.f32 %v164, %v171
      %v174 = vadd.f32 %v165, %v171
      %175 = vst.msk [vmem:[#allocation3] sm:$0xff] %vm158, %v173
      %176 = vst.msk [vmem:[#allocation3 + $0x8] sm:$0xff] %vm158, %v174
    $region21: #{tpu_custom_call.1} parent=1 // pred_fallthru
      _
    // Predicated region
    $region22: #{tpu_custom_call.1} parent=1 // pred_check
      _
    $region23: #{tpu_custom_call.1} parent=1 // pred_check_branch
      %178 = sbr.rel (0) target = $region25
    $region24: #{tpu_custom_call.1} parent=1 // pred_region
      %s180 = ssub.s32 256, 256
      %181 = vsyncadd [#allocation4], %s180
      %s182 = sshll.u32 [#allocation3], 4
      %s183 = int_to_ptr.vmem [resolvable:$true] %s182
      %188 = dma.vmem_to_hbm [thread:$0]  %s183, 256, %s3, [#allocation4], 128, 128, 8
    $region25: #{tpu_custom_call.1} parent=1 // pred_fallthru
      _
    // Predicated region
    $region26: #{tpu_custom_call.1} parent=1 // pred_check
      _
    $region27: #{tpu_custom_call.1} parent=1 // pred_check_branch
      %190 = sbr.rel (0) target = $region29
    $region28: #{tpu_custom_call.1} parent=1 // pred_region
      %191 = dma.done [#allocation4], 256
    $region29: #{tpu_custom_call.1} parent=1 // pred_fallthru
      _
    %192 = vsyncpa [#allocation4], 1

</llo_original>
